<compile_context>
chip_gen: v6e
topology: v6e:2x2x1
jax: 0.10.0
libtpu: 0.0.40
codegen_flags: <defaults>
</compile_context>

<pallas_src>
import functools

import jax
import jax.numpy as jnp
from jax.experimental import pallas as pl
from jax.experimental.pallas import tpu as pltpu


def _concat_kernel(t1_ref, out_ref, *, feat_dim: int, size: int):
    # One batch tile per grid step; concat happens along the lane axis.
    x = t1_ref[...]                                   # (TILE_B, D)
    out_ref[:, :feat_dim] = x                         # copy of t1
    if size > 0:                                      # static Python branch
        out_ref[:, feat_dim:feat_dim + size] = x[:, :size]   # t1[:, 0:size]


def _pick_batch_tile(b: int, max_rows: int = 512) -> int:
    """Largest multiple-of-8 divisor of b that is <= max_rows; else full b."""
    if b <= 8:
        return b
    best = None
    t = 8
    while t <= min(b, max_rows):
        if b % t == 0:
            best = t
        t += 8
    return best if best is not None else b


def slice_cat(t1: jax.Array, t2: jax.Array, size: int) -> jax.Array:
    """Equivalent of torch.cat([t1, t1[:, 0:size]], dim=1). t2 is unused."""
    del t2  # unused by the reference forward; never DMA'd.
    b, d = t1.shape
    assert 0 <= size <= d, "size must be within t1's second dimension"

    tile_b = _pick_batch_tile(b)
    grid = (b // tile_b,)

    out_shape = jax.ShapeDtypeStruct((b, d + size), t1.dtype)
    kernel = functools.partial(_concat_kernel, feat_dim=d, size=size)

    itemsize = jnp.dtype(t1.dtype).itemsize
    cost = pl.CostEstimate(
        flops=0,
        transcendentals=0,
        bytes_accessed=b * d * itemsize + b * (d + size) * itemsize,
    )

    return pl.pallas_call(
        kernel,
        out_shape=out_shape,
        grid_spec=pltpu.PrefetchScalarGridSpec(
            num_scalar_prefetch=0,
            grid=grid,
            in_specs=[
                pl.BlockSpec((tile_b, d), lambda i: (i, 0)),          # t1 tile
            ],
            out_specs=pl.BlockSpec((tile_b, d + size), lambda i: (i, 0)),
        ),
        compiler_params=pltpu.CompilerParams(
            dimension_semantics=("parallel",),   # megacore-shardable copy
        ),
        cost_estimate=cost,
    )(t1)


if __name__ == "__main__":
    key = jax.random.PRNGKey(0)
    k1, k2 = jax.random.split(key)

    B, D = 8, 128
    SIZE = 64

    t1 = jax.random.normal(k1, (B, D), dtype=jnp.float32)
    t2 = jax.random.normal(k2, (B, D), dtype=jnp.float32)  # unused, as in torch

    out = slice_cat(t1, t2, SIZE)
    out = jax.block_until_ready(out)

    # Reference check against plain JAX.
    ref = jnp.concatenate([t1, t1[:, :SIZE]], axis=1)
    assert out.shape == (B, D + SIZE), out.shape
    assert jnp.array_equal(out, ref), "mismatch vs reference"

    # Also exercise the size == 0 edge case.
    out0 = jax.block_until_ready(slice_cat(t1, t2, 0))
    assert jnp.array_equal(out0, t1), "size==0 mismatch"

    print("KERNEL_OK")
</pallas_src>

<mosaic_0001>
module attributes {stable_mosaic.version = 11 : i64} {
  func.func @_concat_kernel(%arg0: i32, %arg1: memref<8x128xf32, #tpu.memory_space<vmem>>, %arg2: memref<8x192xf32, #tpu.memory_space<vmem>>) attributes {dimension_semantics = [#tpu.dimension_semantics<parallel>], iteration_bounds = array<i64: 1>, scalar_prefetch = 0 : i64, scratch_operands = 0 : i64, tpu.core_type = #tpu.core_type<tc>, window_params = [{transform_indices = @transform_0, window_bounds = array<i64: 8, 128>}, {transform_indices = @transform_1, window_bounds = array<i64: 8, 192>}]} {
    %c0 = arith.constant 0 : index
    %c0_0 = arith.constant 0 : index
    %0 = vector.load %arg1[%c0, %c0_0] : memref<8x128xf32, #tpu.memory_space<vmem>>, vector<8x128xf32>
    %c0_1 = arith.constant 0 : index
    %c0_2 = arith.constant 0 : index
    %1 = vector.load %arg2[%c0_1, %c0_2] : memref<8x192xf32, #tpu.memory_space<vmem>>, vector<8x128xf32>
    tpu.vector_store %arg2[%c0_1, %c0_2], %0 {strides = array<i32>} : memref<8x192xf32, #tpu.memory_space<vmem>>, vector<8x128xf32>,
    %2 = vector.extract_strided_slice %0 {offsets = [0, 0], sizes = [8, 64], strides = [1, 1]} : vector<8x128xf32> to vector<8x64xf32>
    %c0_3 = arith.constant 0 : index
    %c128 = arith.constant 128 : index
    %3 = vector.load %arg2[%c0_3, %c128] : memref<8x192xf32, #tpu.memory_space<vmem>>, vector<8x64xf32>
    tpu.vector_store %arg2[%c0_3, %c128], %2 {strides = array<i32>} : memref<8x192xf32, #tpu.memory_space<vmem>>, vector<8x64xf32>,
    return
  }
  func.func @transform_0(%arg0: i32) -> (i32, i32) {
    %c0_i32 = arith.constant 0 : i32
    %c0_i32_0 = arith.constant 0 : i32
    return %arg0, %c0_i32 : i32, i32
  }
  func.func @transform_1(%arg0: i32) -> (i32, i32) {
    %c0_i32 = arith.constant 0 : i32
    %c0_i32_0 = arith.constant 0 : i32
    return %arg0, %c0_i32 : i32, i32
  }
}

</mosaic_0001>

<llo_original>
// kernel: tpu_custom_call.1
$region0: #{tpu_custom_call.1}
  #allocation0 [shape = 'u32[]', space=smem, size = 0x4, offset = 0x4, fixed_abs, tag = 'smem constant byte address 0x4 - core index']
  #allocation1 [shape = 'u32[144,128]{1,0:T(1,128)}', space=vmem, size = 0x12000, scoped, tag = 'internal scratch']
  %s0 = inlined_call_operand.hbm [shape: f32[8,128], index: 0, kind: input, shape index: {}]
  %s1 = inlined_call_operand.hbm [shape: f32[8,192], index: 1, kind: output, shape index: {}]
  %s2 = sld [smem:[#allocation0]]
  $region18: #{tpu_custom_call.1} parent=0
    _
  %s4 = ssub.s32 1, %s2
  %s5 = scalar_select 0, %s4, %s2
  $region1: #{tpu_custom_call.1} parent=0
    #allocation2 [shape = 'u8[4096]{0}', space=vmem, size = 0x1000, scoped, tag = 'input window, operand 0, single buffered']
    #allocation3 [shape = 's32[1]{0}', space=sflag, size = 0x4, scoped, tag = 'scoped memory for tpu_custom_call.1']
    #allocation4 [shape = 's32[1]{0}', space=sflag, size = 0x4, scoped, tag = 'scoped memory for tpu_custom_call.1']
    #allocation5 [shape = 'u8[8192]{0}', space=vmem, size = 0x2000, scoped, tag = 'output window, operand 0, single buffered']
    %6 = vsyncpa [#allocation3], 0
    %7 = vsyncpa [#allocation4], 0
    // Predicated region
    $region2: #{tpu_custom_call.1} parent=1 // pred_check
      _
    $region3: #{tpu_custom_call.1} parent=1 // pred_check_branch
      %9 = sbr.rel (0) target = $region5
    $region4: #{tpu_custom_call.1} parent=1 // pred_region
      %s11 = ssub.s32 128, 128
      %12 = vsyncadd [#allocation3], %s11
      %s14 = sshll.u32 [#allocation2], 4
      %s15 = int_to_ptr.vmem [resolvable:$true] %s14
      %17 = dma.hbm_to_vmem [thread:$0]  %s0, 128, %s15, [#allocation3]
    $region5: #{tpu_custom_call.1} parent=1 // pred_fallthru
      _
    // Predicated region
    $region6: #{tpu_custom_call.1} parent=1 // pred_check
      _
    $region7: #{tpu_custom_call.1} parent=1 // pred_check_branch
      %19 = sbr.rel (0) target = $region9
    $region8: #{tpu_custom_call.1} parent=1 // pred_region
      %20 = dma.done [#allocation3], 128
    $region9: #{tpu_custom_call.1} parent=1 // pred_fallthru
      _
    %v21 = vld [vmem:[#allocation2] sm:$0xff]
    %22 = vst [vmem:[#allocation5] sm:$0xff] %v21
    %vm23 = vcmask 523264
    %24 = vst.msk [vmem:[#allocation5 + $0x8] sm:$0xff] %vm23, %v21
    // Predicated region
    $region10: #{tpu_custom_call.1} parent=1 // pred_check
      _
    $region11: #{tpu_custom_call.1} parent=1 // pred_check_branch
      %26 = sbr.rel (0) target = $region13
    $region12: #{tpu_custom_call.1} parent=1 // pred_region
      %s28 = ssub.s32 256, 256
      %29 = vsyncadd [#allocation4], %s28
      %s31 = sshll.u32 [#allocation5], 4
      %s32 = int_to_ptr.vmem [resolvable:$true] %s31
      %34 = dma.vmem_to_hbm [thread:$0]  %s32, 256, %s1, [#allocation4]
    $region13: #{tpu_custom_call.1} parent=1 // pred_fallthru
      _
    // Predicated region
    $region14: #{tpu_custom_call.1} parent=1 // pred_check
      _
    $region15: #{tpu_custom_call.1} parent=1 // pred_check_branch
      %36 = sbr.rel (0) target = $region17
    $region16: #{tpu_custom_call.1} parent=1 // pred_region
      %37 = dma.done [#allocation4], 256
    $region17: #{tpu_custom_call.1} parent=1 // pred_fallthru
      _
    %38 = vsyncpa [#allocation3], 1
    %39 = vsyncpa [#allocation4], 1

</llo_original>
